<compile_context>
chip_gen: v7x
topology: tpu7x:2x2x1
jax: 0.10.0
libtpu: 0.0.40
codegen_flags: <defaults>
</compile_context>

<pallas_src>
import jax
import jax.numpy as jnp
from jax.experimental import pallas as pl
from jax.experimental.pallas import tpu as pltpu


def _round_up(x, m):
    return ((x + m - 1) // m) * m


def critic_mlp_kernel(x_ref, w1_ref, b1_ref, w2_ref, b2_ref, w3_ref, b3_ref, o_ref):
    # One batch tile per grid step. Dots run on the MXU in the compute dtype of the
    # operands (bf16 by default) with f32 accumulation; bias add + ReLU stay f32.
    x = x_ref[...]                                                    # (TB, S)
    h1 = jnp.dot(x, w1_ref[...], preferred_element_type=jnp.float32) + b1_ref[...]
    h1 = jnp.maximum(h1, 0.0)
    h2 = jnp.dot(h1.astype(w2_ref.dtype), w2_ref[...],
                 preferred_element_type=jnp.float32) + b2_ref[...]
    h2 = jnp.maximum(h2, 0.0)
    out = jnp.dot(h2.astype(w3_ref.dtype), w3_ref[...],
                  preferred_element_type=jnp.float32) + b3_ref[...]
    o_ref[...] = out.astype(o_ref.dtype)                              # lane-dense (TB, A_pad)


def critic_discrete_forward(state, params, *, tile_b=512, compute_dtype=jnp.bfloat16):
    """state: (B, num_states).  params: w1,b1,w2,b2,w3,b3 with w: (in,out), b: (1,out)."""
    w1, b1 = params["w1"], params["b1"]
    w2, b2 = params["w2"], params["b2"]
    w3, b3 = params["w3"], params["b3"]

    B, S = state.shape
    H = w1.shape[1]
    A = w3.shape[1]

    # Lane-dense output: zero-pad num_actions up to a multiple of 128.
    A_pad = _round_up(A, 128)
    if A_pad != A:
        w3 = jnp.zeros((w3.shape[0], A_pad), w3.dtype).at[:, :A].set(w3)
        b3 = jnp.zeros((1, A_pad), b3.dtype).at[:, :A].set(b3)

    # Batch tiling: large tiles amortize per-step overhead; pad B to a tile multiple.
    TB = min(tile_b, _round_up(B, 8))
    B_pad = _round_up(B, TB)
    x = state.astype(compute_dtype)
    if B_pad != B:
        x = jnp.zeros((B_pad, S), compute_dtype).at[:B, :].set(x)

    # Matmul operands in compute_dtype (bf16: half the DMA bytes, full MXU rate);
    # biases stay f32 so the bias-add/ReLU path is f32 on every generation.
    w1c = w1.astype(compute_dtype)
    w2c = w2.astype(compute_dtype)
    w3c = w3.astype(compute_dtype)
    b1f = b1.astype(jnp.float32)
    b2f = b2.astype(jnp.float32)
    b3f = b3.astype(jnp.float32)

    const = lambda i: (0, 0)  # same block every grid step -> stays VMEM-resident

    out = pl.pallas_call(
        critic_mlp_kernel,
        out_shape=jax.ShapeDtypeStruct((B_pad, A_pad), jnp.float32),
        grid=(B_pad // TB,),
        in_specs=[
            pl.BlockSpec((TB, S), lambda i: (i, 0)),   # streamed state tiles
            pl.BlockSpec((S, H), const),               # resident weights / biases
            pl.BlockSpec((1, H), const),
            pl.BlockSpec((H, H), const),
            pl.BlockSpec((1, H), const),
            pl.BlockSpec((H, A_pad), const),
            pl.BlockSpec((1, A_pad), const),
        ],
        out_specs=pl.BlockSpec((TB, A_pad), lambda i: (i, 0)),
        compiler_params=pltpu.CompilerParams(
            dimension_semantics=("parallel",),         # shard batch tiles across TCs (v7x)
        ),
    )(x, w1c, b1f, w2c, b2f, w3c, b3f)

    return out[:B, :A]


def init_params(key, num_states, num_actions, num_hidden_l1):
    """Deterministic synthetic init (PyTorch-Linear-style uniform bounds)."""
    def linear_init(k, fan_in, fan_out):
        k_w, k_b = jax.random.split(k)
        bound = 1.0 / jnp.sqrt(fan_in)
        w = jax.random.uniform(k_w, (fan_in, fan_out), jnp.float32, -bound, bound)
        b = jax.random.uniform(k_b, (1, fan_out), jnp.float32, -bound, bound)
        return w, b

    k1, k2, k3 = jax.random.split(key, 3)
    w1, b1 = linear_init(k1, num_states, num_hidden_l1)
    w2, b2 = linear_init(k2, num_hidden_l1, num_hidden_l1)
    w3, b3 = linear_init(k3, num_hidden_l1, num_actions)
    return {"w1": w1, "b1": b1, "w2": w2, "b2": b2, "w3": w3, "b3": b3}


def reference_forward(state, params):
    h1 = jnp.maximum(state @ params["w1"] + params["b1"], 0.0)
    h2 = jnp.maximum(h1 @ params["w2"] + params["b2"], 0.0)
    return h2 @ params["w3"] + params["b3"]


if __name__ == "__main__":
    num_states = 16
    num_actions = 4
    num_hidden_l1 = 32
    batch = 8

    key = jax.random.PRNGKey(0)
    k_params, k_state, k_state2 = jax.random.split(key, 3)
    params = init_params(k_params, num_states, num_actions, num_hidden_l1)
    state = jax.random.normal(k_state, (batch, num_states), jnp.float32)
    ref = reference_forward(state, params)

    # bf16-operand path (default, perf configuration): looser tolerance.
    out_bf16 = critic_discrete_forward(state, params)
    out_bf16 = jax.block_until_ready(out_bf16)
    assert out_bf16.shape == (batch, num_actions)
    assert jnp.allclose(out_bf16, ref, atol=5e-2, rtol=5e-2)

    # f32-operand path: exact-ish, tight tolerance; also exercises batch padding (B=13).
    out_f32 = critic_discrete_forward(state, params, compute_dtype=jnp.float32)
    out_f32 = jax.block_until_ready(out_f32)
    assert jnp.allclose(out_f32, ref, atol=1e-5, rtol=1e-5)

    state2 = jax.random.normal(k_state2, (13, num_states), jnp.float32)
    out2 = critic_discrete_forward(state2, params, compute_dtype=jnp.float32)
    out2 = jax.block_until_ready(out2)
    assert out2.shape == (13, num_actions)
    assert jnp.allclose(out2, reference_forward(state2, params), atol=1e-5, rtol=1e-5)

    print("KERNEL_OK")
</pallas_src>

<mosaic_0001>
module attributes {stable_mosaic.version = 11 : i64} {
  func.func @critic_mlp_kernel(%arg0: i32, %arg1: memref<8x16xbf16, #tpu.memory_space<vmem>>, %arg2: memref<16x32xbf16, #tpu.memory_space<vmem>>, %arg3: memref<1x32xf32, #tpu.memory_space<vmem>>, %arg4: memref<32x32xbf16, #tpu.memory_space<vmem>>, %arg5: memref<1x32xf32, #tpu.memory_space<vmem>>, %arg6: memref<32x128xbf16, #tpu.memory_space<vmem>>, %arg7: memref<1x128xf32, #tpu.memory_space<vmem>>, %arg8: memref<8x128xf32, #tpu.memory_space<vmem>>) attributes {dimension_semantics = [#tpu.dimension_semantics<parallel>], iteration_bounds = array<i64: 1>, scalar_prefetch = 0 : i64, scratch_operands = 0 : i64, tpu.core_type = #tpu.core_type<tc>, window_params = [{transform_indices = @transform_0, window_bounds = array<i64: 8, 16>}, {pipeline_mode = #tpu.pipeline_mode<synchronous>, transform_indices = @transform_1, window_bounds = array<i64: 16, 32>}, {pipeline_mode = #tpu.pipeline_mode<synchronous>, transform_indices = @transform_2, window_bounds = array<i64: 1, 32>}, {pipeline_mode = #tpu.pipeline_mode<synchronous>, transform_indices = @transform_3, window_bounds = array<i64: 32, 32>}, {pipeline_mode = #tpu.pipeline_mode<synchronous>, transform_indices = @transform_4, window_bounds = array<i64: 1, 32>}, {pipeline_mode = #tpu.pipeline_mode<synchronous>, transform_indices = @transform_5, window_bounds = array<i64: 32, 128>}, {pipeline_mode = #tpu.pipeline_mode<synchronous>, transform_indices = @transform_6, window_bounds = array<i64: 1, 128>}, {transform_indices = @transform_7, window_bounds = array<i64: 8, 128>}]} {
    %c0 = arith.constant 0 : index
    %c0_0 = arith.constant 0 : index
    %0 = vector.load %arg1[%c0, %c0_0] : memref<8x16xbf16, #tpu.memory_space<vmem>>, vector<8x16xbf16>
    %c0_1 = arith.constant 0 : index
    %c0_2 = arith.constant 0 : index
    %1 = vector.load %arg2[%c0_1, %c0_2] : memref<16x32xbf16, #tpu.memory_space<vmem>>, vector<16x32xbf16>
    %cst = arith.constant dense<0.000000e+00> : vector<8x32xf32>
    %2 = tpu.matmul %0, %1, %cst {dimension_numbers = #tpu.dot_dimension_numbers<[1], [0], [0], [1], [0, 0, 1, 1], [], []>} : vector<8x16xbf16>, vector<16x32xbf16>, vector<8x32xf32> -> vector<8x32xf32>
    %c0_3 = arith.constant 0 : index
    %c0_4 = arith.constant 0 : index
    %3 = vector.load %arg3[%c0_3, %c0_4] : memref<1x32xf32, #tpu.memory_space<vmem>>, vector<1x32xf32>
    %4 = vector.broadcast %3 : vector<1x32xf32> to vector<8x32xf32>
    %5 = arith.addf %2, %4 : vector<8x32xf32>
    %cst_5 = arith.constant 0.000000e+00 : f32
    %6 = vector.broadcast %cst_5 : f32 to vector<8x32xf32>
    %7 = arith.maximumf %5, %6 : vector<8x32xf32>
    %8 = arith.truncf %7 : vector<8x32xf32> to vector<8x32xbf16>
    %c0_6 = arith.constant 0 : index
    %c0_7 = arith.constant 0 : index
    %9 = vector.load %arg4[%c0_6, %c0_7] : memref<32x32xbf16, #tpu.memory_space<vmem>>, vector<32x32xbf16>
    %cst_8 = arith.constant dense<0.000000e+00> : vector<8x32xf32>
    %10 = tpu.matmul %8, %9, %cst_8 {dimension_numbers = #tpu.dot_dimension_numbers<[1], [0], [0], [1], [0, 0, 1, 1], [], []>} : vector<8x32xbf16>, vector<32x32xbf16>, vector<8x32xf32> -> vector<8x32xf32>
    %c0_9 = arith.constant 0 : index
    %c0_10 = arith.constant 0 : index
    %11 = vector.load %arg5[%c0_9, %c0_10] : memref<1x32xf32, #tpu.memory_space<vmem>>, vector<1x32xf32>
    %12 = vector.broadcast %11 : vector<1x32xf32> to vector<8x32xf32>
    %13 = arith.addf %10, %12 : vector<8x32xf32>
    %cst_11 = arith.constant 0.000000e+00 : f32
    %14 = vector.broadcast %cst_11 : f32 to vector<8x32xf32>
    %15 = arith.maximumf %13, %14 : vector<8x32xf32>
    %16 = arith.truncf %15 : vector<8x32xf32> to vector<8x32xbf16>
    %c0_12 = arith.constant 0 : index
    %c0_13 = arith.constant 0 : index
    %17 = vector.load %arg6[%c0_12, %c0_13] : memref<32x128xbf16, #tpu.memory_space<vmem>>, vector<32x128xbf16>
    %cst_14 = arith.constant dense<0.000000e+00> : vector<8x128xf32>
    %18 = tpu.matmul %16, %17, %cst_14 {dimension_numbers = #tpu.dot_dimension_numbers<[1], [0], [0], [1], [0, 0, 1, 1], [], []>} : vector<8x32xbf16>, vector<32x128xbf16>, vector<8x128xf32> -> vector<8x128xf32>
    %c0_15 = arith.constant 0 : index
    %c0_16 = arith.constant 0 : index
    %19 = vector.load %arg7[%c0_15, %c0_16] : memref<1x128xf32, #tpu.memory_space<vmem>>, vector<1x128xf32>
    %20 = vector.broadcast %19 : vector<1x128xf32> to vector<8x128xf32>
    %21 = arith.addf %18, %20 : vector<8x128xf32>
    %c0_17 = arith.constant 0 : index
    %c0_18 = arith.constant 0 : index
    %22 = vector.load %arg8[%c0_17, %c0_18] : memref<8x128xf32, #tpu.memory_space<vmem>>, vector<8x128xf32>
    tpu.vector_store %arg8[%c0_17, %c0_18], %21 {strides = array<i32>} : memref<8x128xf32, #tpu.memory_space<vmem>>, vector<8x128xf32>,
    return
  }
  func.func @transform_0(%arg0: i32) -> (i32, i32) {
    %c0_i32 = arith.constant 0 : i32
    %c0_i32_0 = arith.constant 0 : i32
    return %arg0, %c0_i32 : i32, i32
  }
  func.func @transform_1(%arg0: i32) -> (i32, i32) {
    %c0_i32 = arith.constant 0 : i32
    %c0_i32_0 = arith.constant 0 : i32
    %c0_i32_1 = arith.constant 0 : i32
    return %c0_i32, %c0_i32_0 : i32, i32
  }
  func.func @transform_2(%arg0: i32) -> (i32, i32) {
    %c0_i32 = arith.constant 0 : i32
    %c0_i32_0 = arith.constant 0 : i32
    %c0_i32_1 = arith.constant 0 : i32
    return %c0_i32, %c0_i32_0 : i32, i32
  }
  func.func @transform_3(%arg0: i32) -> (i32, i32) {
    %c0_i32 = arith.constant 0 : i32
    %c0_i32_0 = arith.constant 0 : i32
    %c0_i32_1 = arith.constant 0 : i32
    return %c0_i32, %c0_i32_0 : i32, i32
  }
  func.func @transform_4(%arg0: i32) -> (i32, i32) {
    %c0_i32 = arith.constant 0 : i32
    %c0_i32_0 = arith.constant 0 : i32
    %c0_i32_1 = arith.constant 0 : i32
    return %c0_i32, %c0_i32_0 : i32, i32
  }
  func.func @transform_5(%arg0: i32) -> (i32, i32) {
    %c0_i32 = arith.constant 0 : i32
    %c0_i32_0 = arith.constant 0 : i32
    %c0_i32_1 = arith.constant 0 : i32
    return %c0_i32, %c0_i32_0 : i32, i32
  }
  func.func @transform_6(%arg0: i32) -> (i32, i32) {
    %c0_i32 = arith.constant 0 : i32
    %c0_i32_0 = arith.constant 0 : i32
    %c0_i32_1 = arith.constant 0 : i32
    return %c0_i32, %c0_i32_0 : i32, i32
  }
  func.func @transform_7(%arg0: i32) -> (i32, i32) {
    %c0_i32 = arith.constant 0 : i32
    %c0_i32_0 = arith.constant 0 : i32
    return %arg0, %c0_i32 : i32, i32
  }
}

</mosaic_0001>

<llo_original>
// kernel: tpu_custom_call.1
$region0: #{tpu_custom_call.1}
  #allocation0 [shape = 'u32[]', space=smem, size = 0x4, offset = 0x4, fixed_abs, tag = 'smem constant byte address 0x4 - core index']
  #allocation1 [shape = 'u32[144,128]{1,0:T(1,128)}', space=vmem, size = 0x12000, scoped, tag = 'internal scratch']
  %s0 = inlined_call_operand.hbm [shape: bf16[8,16], index: 0, kind: input, shape index: {}]
  %s1 = inlined_call_operand.hbm [shape: bf16[16,32], index: 1, kind: input, shape index: {}]
  %s2 = inlined_call_operand.vmem [shape: f32[1,32], index: 2, kind: input, shape index: {}]
  %s3 = inlined_call_operand.hbm [shape: bf16[32,32], index: 3, kind: input, shape index: {}]
  %s4 = inlined_call_operand.vmem [shape: f32[1,32], index: 4, kind: input, shape index: {}]
  %s5 = inlined_call_operand.vmem [shape: bf16[32,128], index: 5, kind: input, shape index: {}]
  %s6 = inlined_call_operand.vmem [shape: f32[1,128], index: 6, kind: input, shape index: {}]
  %s7 = inlined_call_operand.hbm [shape: f32[8,128], index: 7, kind: output, shape index: {}]
  %s8 = sld [smem:[#allocation0]]
  $region50: #{tpu_custom_call.1} parent=0
    _
  %s10 = ssub.s32 1, %s8
  %s11 = scalar_select 0, %s10, %s8
  $region1: #{tpu_custom_call.1} parent=0
    #allocation2 [shape = 'u8[2048]{0}', space=vmem, size = 0x800, scoped, tag = 'input window, operand 0, single buffered']
    #allocation3 [shape = 's32[1]{0}', space=sflag, size = 0x4, scoped, tag = 'scoped memory for tpu_custom_call.1']
    #allocation4 [shape = 's32[1]{0}', space=sflag, size = 0x4, scoped, tag = 'scoped memory for tpu_custom_call.1']
    #allocation5 [shape = 'u8[4096]{0}', space=vmem, size = 0x1000, scoped, tag = 'input window, operand 1, single buffered']
    #allocation6 [shape = 's32[1]{0}', space=sflag, size = 0x4, scoped, tag = 'scoped memory for tpu_custom_call.1']
    #allocation7 [shape = 'u8[8192]{0}', space=vmem, size = 0x2000, scoped, tag = 'input window, operand 3, single buffered']
    #allocation8 [shape = 'u8[4096]{0}', space=vmem, size = 0x1000, scoped, tag = 'output window, operand 0, single buffered']
    %12 = vsyncpa [#allocation3], 0
    %13 = vsyncpa [#allocation6], 0
    %14 = vsyncpa [#allocation4], 0
    // Predicated region
    $region2: #{tpu_custom_call.1} parent=1 // pred_check
      _
    $region3: #{tpu_custom_call.1} parent=1 // pred_check_branch
      %16 = sbr.rel (0) target = $region5
    $region4: #{tpu_custom_call.1} parent=1 // pred_region
      %s18 = ssub.s32 64, 64
      %19 = vsyncadd [#allocation3], %s18
      %s21 = sshll.u32 [#allocation2], 4
      %s22 = int_to_ptr.vmem [resolvable:$true] %s21
      %24 = dma.hbm_to_vmem [thread:$0]  %s0, 64, %s22, [#allocation3]
    $region5: #{tpu_custom_call.1} parent=1 // pred_fallthru
      _
    // Predicated region
    $region6: #{tpu_custom_call.1} parent=1 // pred_check
      _
    $region7: #{tpu_custom_call.1} parent=1 // pred_check_branch
      %26 = sbr.rel (0) target = $region9
    $region8: #{tpu_custom_call.1} parent=1 // pred_region
      %s28 = ssub.s32 128, 128
      %29 = vsyncadd [#allocation6], %s28
      %s30 = sshll.u32 [#allocation5], 4
      %s31 = int_to_ptr.vmem [resolvable:$true] %s30
      %36 = dma.hbm_to_vmem [thread:$0]  %s1, 128, %s31, [#allocation6], 64, 64, 4
    $region9: #{tpu_custom_call.1} parent=1 // pred_fallthru
      _
    // Predicated region
    $region10: #{tpu_custom_call.1} parent=1 // pred_check
      _
    $region11: #{tpu_custom_call.1} parent=1 // pred_check_branch
      %38 = sbr.rel (0) target = $region13
    $region12: #{tpu_custom_call.1} parent=1 // pred_region
      _
    $region13: #{tpu_custom_call.1} parent=1 // pred_fallthru
      _
    // Predicated region
    $region14: #{tpu_custom_call.1} parent=1 // pred_check
      _
    $region15: #{tpu_custom_call.1} parent=1 // pred_check_branch
      %40 = sbr.rel (0) target = $region17
    $region16: #{tpu_custom_call.1} parent=1 // pred_region
      %s42 = ssub.s32 256, 256
      %43 = vsyncadd [#allocation6], %s42
      %s44 = sshll.u32 [#allocation7], 4
      %s45 = int_to_ptr.vmem [resolvable:$true] %s44
      %50 = dma.hbm_to_vmem [thread:$0]  %s3, 256, %s45, [#allocation6], 64, 64, 4
    $region17: #{tpu_custom_call.1} parent=1 // pred_fallthru
      _
    // Predicated region
    $region18: #{tpu_custom_call.1} parent=1 // pred_check
      _
    $region19: #{tpu_custom_call.1} parent=1 // pred_check_branch
      %52 = sbr.rel (0) target = $region21
    $region20: #{tpu_custom_call.1} parent=1 // pred_region
      _
    $region21: #{tpu_custom_call.1} parent=1 // pred_fallthru
      _
    // Predicated region
    $region22: #{tpu_custom_call.1} parent=1 // pred_check
      _
    $region23: #{tpu_custom_call.1} parent=1 // pred_check_branch
      %54 = sbr.rel (0) target = $region25
    $region24: #{tpu_custom_call.1} parent=1 // pred_region
      _
    $region25: #{tpu_custom_call.1} parent=1 // pred_fallthru
      _
    // Predicated region
    $region26: #{tpu_custom_call.1} parent=1 // pred_check
      _
    $region27: #{tpu_custom_call.1} parent=1 // pred_check_branch
      %56 = sbr.rel (0) target = $region29
    $region28: #{tpu_custom_call.1} parent=1 // pred_region
      _
    $region29: #{tpu_custom_call.1} parent=1 // pred_fallthru
      _
    // Predicated region
    $region30: #{tpu_custom_call.1} parent=1 // pred_check
      _
    $region31: #{tpu_custom_call.1} parent=1 // pred_check_branch
      %58 = sbr.rel (0) target = $region33
    $region32: #{tpu_custom_call.1} parent=1 // pred_region
      %59 = dma.done [#allocation3], 64
    $region33: #{tpu_custom_call.1} parent=1 // pred_fallthru
      _
    // Predicated region
    $region34: #{tpu_custom_call.1} parent=1 // pred_check
      _
    $region35: #{tpu_custom_call.1} parent=1 // pred_check_branch
      %61 = sbr.rel (0) target = $region37
    $region36: #{tpu_custom_call.1} parent=1 // pred_region
      %62 = dma.done [#allocation6], 128
    $region37: #{tpu_custom_call.1} parent=1 // pred_fallthru
      _
    // Predicated region
    $region38: #{tpu_custom_call.1} parent=1 // pred_check
      _
    $region39: #{tpu_custom_call.1} parent=1 // pred_check_branch
      %64 = sbr.rel (0) target = $region41
    $region40: #{tpu_custom_call.1} parent=1 // pred_region
      %65 = dma.done [#allocation6], 256
    $region41: #{tpu_custom_call.1} parent=1 // pred_fallthru
      _
    %v67 = vld [vmem:[#allocation2] sm:$0xf]
    %v68 = vld [vmem:[#allocation5] sm:$0xf]
    %v69 = vld [vmem:[#allocation5 + $0x4] sm:$0xf]
    %v70 = vld [vmem:[%s2] sm:$0x1]
    %v72 = vlaneseq
    %v73 = vshrl.u32 %v72, 7
    %v74 = vsub.s32 0, %v73
    %v75 = vrot.slane %v70, %v74
    %v79 = vunpack.c.l.b16 %v68
    %v80 = vunpack.c.l.b16 %v69
    %v81 = vpack.c.b16 %v80, %v79
    %vm83 = vcmask 130048
    %v85 = vsel %vm83, %v67, 0
    %87 = vmatprep.subr.bf16.mxu0 0
    %88 = vmatpush1.bf16.msra.mxu0 %v81
    %89 = vmatprep.subr.bf16.mxu0 0
    %90 = vmatpush1.bf16.msra.mxu0 0
    %91 = vmatprep.subr.bf16.mxu0 0
    %92 = vmatpush1.bf16.msra.mxu0 0
    %93 = vmatprep.subr.bf16.mxu0 0
    %94 = vmatpush1.bf16.msra.mxu0 0
    %95 = vmatprep.subr.bf16.mxu0 0
    %96 = vmatpush1.bf16.msra.mxu0 0
    %97 = vmatprep.subr.bf16.mxu0 0
    %98 = vmatpush1.bf16.msra.mxu0 0
    %99 = vmatprep.subr.bf16.mxu0 0
    %100 = vmatpush1.bf16.msra.mxu0 0
    %101 = vmatprep.subr.bf16.mxu0 0
    %102 = vmatpush1.bf16.msra.mxu0 0
    %103 = vmatprep.subr.bf16.mxu0 0
    %104 = vmatpush1.bf16.msra.mxu0 0
    %105 = vmatprep.subr.bf16.mxu0 0
    %106 = vmatpush1.bf16.msra.mxu0 0
    %107 = vmatprep.subr.bf16.mxu0 0
    %108 = vmatpush1.bf16.msra.mxu0 0
    %109 = vmatprep.subr.bf16.mxu0 0
    %110 = vmatpush1.bf16.msra.mxu0 0
    %111 = vmatprep.subr.bf16.mxu0 0
    %112 = vmatpush1.bf16.msra.mxu0 0
    %113 = vmatprep.subr.bf16.mxu0 0
    %114 = vmatpush1.bf16.msra.mxu0 0
    %115 = vmatprep.subr.bf16.mxu0 0
    %116 = vmatpush1.bf16.msra.mxu0 0
    %117 = vmatprep.subr.bf16.mxu0 0
    %118 = vmatpush1.bf16.msra.mxu0 0
    %119 = vmatprep.mubr.bf16.mxu0 0
    %120 = vmatmul.mubr.bf16.gmra.mrb[0].mxu0 %v85
    %v121 = vpop.f32.mrb[0].mxu0
    %v122 = vadd.f32 %v75, %v121
    %v123 = vpop.f32.mrb[0].mxu0
    %v124 = vpop.f32.mrb[0].mxu0
    %v125 = vpop.f32.mrb[0].mxu0
    %126 = vdwg.mxu0
    %v127 = vmax.f32 %v122, 0.0
    %v128 = vpack.c.bf16 %v127, %v127
    %v129 = vld [vmem:[#allocation7] sm:$0xf]
    %v130 = vld [vmem:[#allocation7 + $0x4] sm:$0xf]
    %v131 = vld [vmem:[#allocation7 + $0x8] sm:$0xf]
    %v132 = vld [vmem:[#allocation7 + $0xc] sm:$0xf]
    %v133 = vld [vmem:[%s4] sm:$0x1]
    %v135 = vlaneseq
    %v136 = vshrl.u32 %v135, 7
    %v137 = vsub.s32 0, %v136
    %v138 = vrot.slane %v133, %v137
    %v144 = vunpack.c.l.b16 %v129
    %v145 = vunpack.c.l.b16 %v130
    %v146 = vunpack.c.l.b16 %v131
    %v147 = vunpack.c.l.b16 %v132
    %v148 = vpack.c.b16 %v145, %v144
    %v149 = vpack.c.b16 %v147, %v146
    %vm152 = vcmask 261120
    %v154 = vsel %vm152, %v128, 0
    %156 = vmatprep.subr.bf16.mxu0 0
    %157 = vmatpush1.bf16.msra.mxu0 %v148
    %158 = vmatprep.subr.bf16.mxu0 0
    %159 = vmatpush1.bf16.msra.mxu0 %v149
    %160 = vmatprep.subr.bf16.mxu0 0
    %161 = vmatpush1.bf16.msra.mxu0 0
    %162 = vmatprep.subr.bf16.mxu0 0
    %163 = vmatpush1.bf16.msra.mxu0 0
    %164 = vmatprep.subr.bf16.mxu0 0
    %165 = vmatpush1.bf16.msra.mxu0 0
    %166 = vmatprep.subr.bf16.mxu0 0
    %167 = vmatpush1.bf16.msra.mxu0 0
    %168 = vmatprep.subr.bf16.mxu0 0
    %169 = vmatpush1.bf16.msra.mxu0 0
    %170 = vmatprep.subr.bf16.mxu0 0
    %171 = vmatpush1.bf16.msra.mxu0 0
    %172 = vmatprep.subr.bf16.mxu0 0
    %173 = vmatpush1.bf16.msra.mxu0 0
    %174 = vmatprep.subr.bf16.mxu0 0
    %175 = vmatpush1.bf16.msra.mxu0 0
    %176 = vmatprep.subr.bf16.mxu0 0
    %177 = vmatpush1.bf16.msra.mxu0 0
    %178 = vmatprep.subr.bf16.mxu0 0
    %179 = vmatpush1.bf16.msra.mxu0 0
    %180 = vmatprep.subr.bf16.mxu0 0
    %181 = vmatpush1.bf16.msra.mxu0 0
    %182 = vmatprep.subr.bf16.mxu0 0
    %183 = vmatpush1.bf16.msra.mxu0 0
    %184 = vmatprep.subr.bf16.mxu0 0
    %185 = vmatpush1.bf16.msra.mxu0 0
    %186 = vmatprep.subr.bf16.mxu0 0
    %187 = vmatpush1.bf16.msra.mxu0 0
    %188 = vmatprep.mubr.bf16.mxu0 0
    %189 = vmatmul.mubr.bf16.gmra.mrb[0].mxu0 %v154
    %v190 = vpop.f32.mrb[0].mxu0
    %v191 = vadd.f32 %v138, %v190
    %v192 = vpop.f32.mrb[0].mxu0
    %v193 = vpop.f32.mrb[0].mxu0
    %v194 = vpop.f32.mrb[0].mxu0
    %195 = vdwg.mxu0
    %v196 = vmax.f32 %v191, 0.0
    %v197 = vpack.c.bf16 %v196, %v196
    %v198 = vld [vmem:[%s5] sm:$0xf]
    %v199 = vld [vmem:[%s5 + $0x4] sm:$0xf]
    %v200 = vld [vmem:[%s5 + $0x8] sm:$0xf]
    %v201 = vld [vmem:[%s5 + $0xc] sm:$0xf]
    %v202 = vld [vmem:[%s6] sm:$0x1]
    %v204 = vlaneseq
    %v205 = vshrl.u32 %v204, 7
    %v206 = vsub.s32 0, %v205
    %v207 = vrot.slane %v202, %v206
    %v213 = vunpack.c.l.b16 %v198
    %v214 = vunpack.c.l.b16 %v199
    %v215 = vunpack.c.l.b16 %v200
    %v216 = vunpack.c.l.b16 %v201
    %v217 = vpack.c.b16 %v214, %v213
    %v218 = vpack.c.b16 %v216, %v215
    %v222 = vsel %vm152, %v197, 0
    %224 = vmatprep.subr.bf16.mxu0 0
    %225 = vmatpush1.bf16.msra.mxu0 %v217
    %226 = vmatprep.subr.bf16.mxu0 0
    %227 = vmatpush1.bf16.msra.mxu0 %v218
    %228 = vmatprep.subr.bf16.mxu0 0
    %229 = vmatpush1.bf16.msra.mxu0 0
    %230 = vmatprep.subr.bf16.mxu0 0
    %231 = vmatpush1.bf16.msra.mxu0 0
    %232 = vmatprep.subr.bf16.mxu0 0
    %233 = vmatpush1.bf16.msra.mxu0 0
    %234 = vmatprep.subr.bf16.mxu0 0
    %235 = vmatpush1.bf16.msra.mxu0 0
    %236 = vmatprep.subr.bf16.mxu0 0
    %237 = vmatpush1.bf16.msra.mxu0 0
    %238 = vmatprep.subr.bf16.mxu0 0
    %239 = vmatpush1.bf16.msra.mxu0 0
    %240 = vmatprep.subr.bf16.mxu0 0
    %241 = vmatpush1.bf16.msra.mxu0 0
    %242 = vmatprep.subr.bf16.mxu0 0
    %243 = vmatpush1.bf16.msra.mxu0 0
    %244 = vmatprep.subr.bf16.mxu0 0
    %245 = vmatpush1.bf16.msra.mxu0 0
    %246 = vmatprep.subr.bf16.mxu0 0
    %247 = vmatpush1.bf16.msra.mxu0 0
    %248 = vmatprep.subr.bf16.mxu0 0
    %249 = vmatpush1.bf16.msra.mxu0 0
    %250 = vmatprep.subr.bf16.mxu0 0
    %251 = vmatpush1.bf16.msra.mxu0 0
    %252 = vmatprep.subr.bf16.mxu0 0
    %253 = vmatpush1.bf16.msra.mxu0 0
    %254 = vmatprep.subr.bf16.mxu0 0
    %255 = vmatpush1.bf16.msra.mxu0 0
    %256 = vmatprep.mubr.bf16.mxu0 0
    %257 = vmatmul.mubr.bf16.gmra.mrb[0].mxu0 %v222
    %v258 = vpop.f32.mrb[0].mxu0
    %v259 = vadd.f32 %v207, %v258
    %v260 = vpop.f32.mrb[0].mxu0
    %v261 = vpop.f32.mrb[0].mxu0
    %v262 = vpop.f32.mrb[0].mxu0
    %263 = vdwg.mxu0
    %264 = vst [vmem:[#allocation8] sm:$0xff] %v259
    // Predicated region
    $region42: #{tpu_custom_call.1} parent=1 // pred_check
      _
    $region43: #{tpu_custom_call.1} parent=1 // pred_check_branch
      %266 = sbr.rel (0) target = $region45
    $region44: #{tpu_custom_call.1} parent=1 // pred_region
      %s268 = ssub.s32 128, 128
      %269 = vsyncadd [#allocation4], %s268
      %s271 = sshll.u32 [#allocation8], 4
      %s272 = int_to_ptr.vmem [resolvable:$true] %s271
      %274 = dma.vmem_to_hbm [thread:$0]  %s272, 128, %s7, [#allocation4]
    $region45: #{tpu_custom_call.1} parent=1 // pred_fallthru
      _
    // Predicated region
    $region46: #{tpu_custom_call.1} parent=1 // pred_check
      _
    $region47: #{tpu_custom_call.1} parent=1 // pred_check_branch
      %276 = sbr.rel (0) target = $region49
    $region48: #{tpu_custom_call.1} parent=1 // pred_region
      %277 = dma.done [#allocation4], 128
    $region49: #{tpu_custom_call.1} parent=1 // pred_fallthru
      _
    %278 = vsyncpa [#allocation3], 1
    %279 = vsyncpa [#allocation6], 1
    %280 = vsyncpa [#allocation4], 1

</llo_original>
